<compile_context>
chip_gen: v5e
topology: v5e:2x2
jax: 0.10.0
libtpu: 0.0.40
codegen_flags: <defaults>
</compile_context>

<pallas_src>
import functools

import jax
import jax.numpy as jnp
from jax.experimental import pallas as pl
from jax.experimental.pallas import tpu as pltpu


# --------------------------------------------------------------------------
# generation-aware VMEM budget
# --------------------------------------------------------------------------
def _vmem_limit_bytes():
    """Per-generation VMEM budget: ~96 MiB on 128 MiB parts (v5e/v6e), ~48 MiB on
    64 MiB parts (v7x).  Conservative fallback if the query is unavailable."""
    try:
        cap = int(pltpu.get_tpu_info().vmem_capacity_bytes)
    except Exception:
        cap = 64 * 1024 * 1024
    return int(min(max(cap - 16 * 1024 * 1024, 32 * 1024 * 1024), 96 * 1024 * 1024))


_VMEM_LIMIT = _vmem_limit_bytes()


def _pick_tile(n, candidates):
    """Largest candidate that divides n; falls back to the full extent."""
    for c in candidates:
        if c <= n and n % c == 0:
            return c
    return n


# --------------------------------------------------------------------------
# init-time weight preparation (hoisted out of the forward path)
# --------------------------------------------------------------------------
def prepare_linear(w, b):
    """torch-layout (Out, In) weight -> (In, Out) bf16 + (1, Out) f32 bias row."""
    n_out, _ = w.shape
    return w.T.astype(jnp.bfloat16), b.reshape(1, n_out).astype(jnp.float32)


def prepare_decode_params(w_copy_proj, b_copy_proj, w_copy_lm, w_lm, kg_vocab_mask):
    """One-time layout prep for the _decode_forced logits head:
      - copy_proj split into user / dialog halves, transposed to (In, Out), bf16
      - kg_vocab_mask folded into the copy LM head weight
      - lm_head and masked copy_lm_head concatenated into one (2D, Vp) bf16 weight
        (single K=2D MXU matmul per vocab tile), V padded to a multiple of 128."""
    D = w_copy_proj.shape[0]
    V = w_lm.shape[0]
    Vp = ((V + 127) // 128) * 128
    wcu_t, bc_row = prepare_linear(w_copy_proj[:, :D], b_copy_proj)      # user half + bias
    wcd_t = w_copy_proj[:, D:].T.astype(jnp.bfloat16)                    # (D, D) dialog half
    mask_row = kg_vocab_mask.reshape(1, V).astype(jnp.float32)
    wlm_t = w_lm.T.astype(jnp.bfloat16)                                  # (D, V)
    wcopy_masked_t = (w_copy_lm.T * mask_row).astype(jnp.bfloat16)       # (D, V), mask folded
    wcat = jnp.concatenate([wlm_t, wcopy_masked_t], axis=0)              # (2D, V)
    if Vp != V:
        wcat = jnp.pad(wcat, ((0, 0), (0, Vp - V)))
    return dict(wcu_t=wcu_t, bc_row=bc_row, wcd_t=wcd_t, wcat=wcat, D=D, V=V, Vp=Vp)


# --------------------------------------------------------------------------
# generic linear kernel: y = x @ W_t + b   (W pre-transposed to (In, Out), bf16)
# --------------------------------------------------------------------------
def _linear_kernel(x_ref, wt_ref, b_ref, y_ref):
    y_ref[...] = (
        jnp.dot(x_ref[...], wt_ref[...], preferred_element_type=jnp.float32)
        + b_ref[...]
    )


def linear(x, wt_bf16, b_row_f32, tm_max=512):
    """x: (..., In) -> (..., Out) f32.  wt_bf16 is the prepared (In, Out) bf16
    weight; rows are tiled / pipelined, bf16 operands with f32 MXU accumulation."""
    lead = x.shape[:-1]
    n_in, n_out = wt_bf16.shape
    x2 = x.reshape(-1, n_in).astype(jnp.bfloat16)
    M = x2.shape[0]
    tm = _pick_tile(M, [c for c in (512, 256, 128, 64, 32, 16, 8) if c <= tm_max])
    if tm == M and M > tm_max:            # large, awkward row count: pad and tile
        tm = 256
    Mp = ((M + tm - 1) // tm) * tm
    if Mp != M:
        x2 = jnp.pad(x2, ((0, Mp - M), (0, 0)))

    y = pl.pallas_call(
        _linear_kernel,
        out_shape=jax.ShapeDtypeStruct((Mp, n_out), jnp.float32),
        grid=(Mp // tm,),
        in_specs=[
            pl.BlockSpec((tm, n_in), lambda i: (i, 0)),
            pl.BlockSpec((n_in, n_out), lambda i: (0, 0)),
            pl.BlockSpec((1, n_out), lambda i: (0, 0)),
        ],
        out_specs=pl.BlockSpec((tm, n_out), lambda i: (i, 0)),
        compiler_params=pltpu.CompilerParams(
            dimension_semantics=("parallel",),
            vmem_limit_bytes=_VMEM_LIMIT),
    )(x2, wt_bf16, b_row_f32)
    return y[:M].reshape(*lead, n_out)


# --------------------------------------------------------------------------
# rec_model.kg_attention: masked additive attention pooling over entities.
# entity_rep (B, L, U), mask (B, L) -> user_rep (B, U)
# scores / softmax are kept lane-dense (Bb, L); a block of batches per grid step.
# --------------------------------------------------------------------------
def _kg_attn_kernel(rep_ref, mask_ref, wa_ref, va_ref, out_ref):
    Bb, L, U = rep_ref.shape
    h = rep_ref[...]                                                  # (Bb, L, U)
    t = jnp.tanh(jnp.dot(h.reshape(Bb * L, U), wa_ref[...],
                         preferred_element_type=jnp.float32))         # (Bb*L, U)
    s = jnp.sum(t.reshape(Bb, L, U) * va_ref[...], axis=-1)           # (Bb, L) lane-dense
    s = jnp.where(mask_ref[...] > 0.0, s, -1e9)
    s = s - jnp.max(s, axis=-1, keepdims=True)
    e = jnp.exp(s)
    w = e / jnp.sum(e, axis=-1, keepdims=True)                        # (Bb, L)
    out_ref[...] = jnp.sum(w[:, :, None] * h, axis=1)                 # (Bb, U)


def kg_attention_pool(entity_rep, entity_mask, w_attn, v_attn, bb_max=64):
    """entity_rep (B, L, U), entity_mask (B, L) -> (B, U)."""
    B, L, U = entity_rep.shape
    bb = _pick_tile(B, [c for c in (64, 32, 16, 8) if c <= bb_max])
    out = pl.pallas_call(
        _kg_attn_kernel,
        out_shape=jax.ShapeDtypeStruct((B, U), jnp.float32),
        grid=(B // bb,),
        in_specs=[
            pl.BlockSpec((bb, L, U), lambda i: (i, 0, 0)),
            pl.BlockSpec((bb, L), lambda i: (i, 0)),
            pl.BlockSpec((U, U), lambda i: (0, 0)),
            pl.BlockSpec((1, 1, U), lambda i: (0, 0, 0)),
        ],
        out_specs=pl.BlockSpec((bb, U), lambda i: (i, 0)),
        compiler_params=pltpu.CompilerParams(
            dimension_semantics=("parallel",),
            vmem_limit_bytes=_VMEM_LIMIT),
    )(entity_rep.astype(jnp.float32), entity_mask.astype(jnp.float32),
      w_attn.astype(jnp.float32), v_attn.reshape(1, 1, U).astype(jnp.float32))
    return out


# --------------------------------------------------------------------------
# copy_proj hidden-state precompute + concat:
#   xh[b, t, :D]  = dialog_latent[b, t]              (bf16)
#   xh[b, t, D:]  = dialog_latent[b, t] @ Wcd + uh[b] (bf16, f32 accum)
# where uh = user_att @ Wcu + b_copy_proj is computed once per batch row.
# --------------------------------------------------------------------------
def _copy_hidden_kernel(dl_ref, uh_ref, wcd_ref, xh_ref):
    D = wcd_ref.shape[0]
    dl = dl_ref[0]                                                    # (tt, D) bf16
    h = (jnp.dot(dl, wcd_ref[...], preferred_element_type=jnp.float32)
         + uh_ref[0])                                                 # (tt, D) f32
    xh_ref[0, :, 0:D] = dl
    xh_ref[0, :, D:2 * D] = h.astype(xh_ref.dtype)


def copy_hidden_concat(dl_bf16, uh, wcd_t_bf16, tt_max=256):
    """dl_bf16 (B, T, D) bf16, uh (B, D) f32 -> xh (B, T, 2D) bf16."""
    B, T, D = dl_bf16.shape
    tt = _pick_tile(T, [c for c in (256, 128, 64, 32, 16, 8) if c <= tt_max])
    return pl.pallas_call(
        _copy_hidden_kernel,
        out_shape=jax.ShapeDtypeStruct((B, T, 2 * D), jnp.bfloat16),
        grid=(B, T // tt),
        in_specs=[
            pl.BlockSpec((1, tt, D), lambda b, t: (b, t, 0)),
            pl.BlockSpec((1, 1, D), lambda b, t: (b, 0, 0)),
            pl.BlockSpec((D, D), lambda b, t: (0, 0)),
        ],
        out_specs=pl.BlockSpec((1, tt, 2 * D), lambda b, t: (b, t, 0)),
        compiler_params=pltpu.CompilerParams(
            dimension_semantics=("parallel", "parallel"),
            vmem_limit_bytes=_VMEM_LIMIT),
    )(dl_bf16, uh.reshape(B, 1, D).astype(jnp.float32), wcd_t_bf16)


# --------------------------------------------------------------------------
# _decode_forced fused logits head: vocab-streaming over flattened rows
# grid = (Mp // tm, Vp // tv)   (V axis innermost / "arbitrary")
# --------------------------------------------------------------------------
def _gen_logits_kernel(xh_ref, wcat_ref, logits_ref, preds_ref, m_sc, i_sc,
                       *, v_valid, v_padded):
    v = pl.program_id(1)
    tv = wcat_ref.shape[1]

    @pl.when(v == 0)
    def _init():
        m_sc[...] = jnp.full(m_sc.shape, -jnp.inf, m_sc.dtype)
        i_sc[...] = jnp.zeros(i_sc.shape, i_sc.dtype)

    # one K=2D MXU matmul per vocab tile:
    #   [dl | copy_hidden] @ [[W_lm] ; [W_copy_lm * kg_vocab_mask]]
    s = jnp.dot(xh_ref[...], wcat_ref[...], preferred_element_type=jnp.float32)
    logits_ref[...] = s                                               # (tm, tv)

    # online first-index argmax across V tiles (padded vocab columns excluded)
    gcol = jax.lax.broadcasted_iota(jnp.int32, s.shape, 1) + v * tv
    s_red = jnp.where(gcol < v_valid, s, -jnp.inf) if v_padded != v_valid else s
    tile_max = jnp.max(s_red, axis=-1, keepdims=True)                 # (tm, 1)
    tile_idx = jnp.min(jnp.where(s_red == tile_max, gcol, v_padded),
                       axis=-1, keepdims=True)                        # (tm, 1)
    better = tile_max > m_sc[...]
    i_sc[...] = jnp.where(better, tile_idx, i_sc[...])
    m_sc[...] = jnp.maximum(m_sc[...], tile_max)

    @pl.when(v == pl.num_programs(1) - 1)
    def _finalize():
        preds_ref[...] = i_sc[...]


def _choose_logits_tiles(M, Vp, K, budget):
    """Pick (tm, tv) so double-buffered blocks fit the per-generation VMEM budget,
    prioritizing a large row tile (fewer full-V weight sweeps)."""
    usable = int(budget * 0.8)
    tms = [t for t in (1024, 512, 256, 128, 64, 32, 16, 8) if t <= max(M, 8)]
    if not tms:
        tms = [8]
    tvs = sorted({t for t in (8192, 4096, 2048, 1024, 512, 256, 128)
                  if t <= Vp and Vp % t == 0} | ({Vp} if Vp <= 8192 else set()),
                 reverse=True)
    if not tvs:
        tvs = [Vp]
    for tm in tms:
        for tv in tvs:
            need = 2 * (tm * K * 2 + K * tv * 2 + tm * tv * 4) + 64 * tm
            if need <= usable:
                return tm, tv
    return tms[-1], tvs[-1]


def decode_forced_logits(dialog_latent, user_att, p):
    """Returns (sum_logits (B, T, V) f32, preds (B, T) i32)."""
    B, T, D = dialog_latent.shape
    V, Vp = p["V"], p["Vp"]
    dl_bf = dialog_latent.astype(jnp.bfloat16)

    # copy_proj user half (+ bias): tiny (B, D) row-tiled linear
    uh = linear(user_att, p["wcu_t"], p["bc_row"])                    # (B, D) f32
    # fused copy_proj(dialog half) + concat -> (B, T, 2D) bf16
    xh = copy_hidden_concat(dl_bf, uh, p["wcd_t"])

    # flatten rows: the logits-head row tile is no longer capped by T
    M = B * T
    xh2 = xh.reshape(M, 2 * D)
    tm, tv = _choose_logits_tiles(M, Vp, 2 * D, _VMEM_LIMIT)
    Mp = ((M + tm - 1) // tm) * tm
    if Mp != M:
        xh2 = jnp.pad(xh2, ((0, Mp - M), (0, 0)))

    kernel = functools.partial(_gen_logits_kernel, v_valid=V, v_padded=Vp)
    # TODO(synk): for v5e a bf16 logits output would halve the writeback stream;
    # kept f32 here to match the module's returned sum_logits semantics.
    logits, preds = pl.pallas_call(
        kernel,
        out_shape=(
            jax.ShapeDtypeStruct((Mp, Vp), jnp.float32),
            jax.ShapeDtypeStruct((Mp, 1), jnp.int32),
        ),
        grid=(Mp // tm, Vp // tv),
        in_specs=[
            pl.BlockSpec((tm, 2 * D), lambda i, v: (i, 0)),    # [dl | h] rows
            pl.BlockSpec((2 * D, tv), lambda i, v: (0, v)),    # fused head (streamed)
        ],
        out_specs=(
            pl.BlockSpec((tm, tv), lambda i, v: (i, v)),
            pl.BlockSpec((tm, 1), lambda i, v: (i, 0)),
        ),
        scratch_shapes=[
            pltpu.VMEM((tm, 1), jnp.float32),     # running max
            pltpu.VMEM((tm, 1), jnp.int32),       # running argmax
        ],
        compiler_params=pltpu.CompilerParams(
            dimension_semantics=("parallel", "arbitrary"),
            vmem_limit_bytes=_VMEM_LIMIT),
    )(xh2, p["wcat"])

    sum_logits = logits[:M, :V].reshape(B, T, V)
    preds_out = preds[:M, 0].reshape(B, T)
    return sum_logits, preds_out


# --------------------------------------------------------------------------
if __name__ == "__main__":
    key = jax.random.PRNGKey(0)
    B, T, D, U, L, V, NE = 2, 8, 64, 32, 8, 384, 64
    ks = jax.random.split(key, 12)

    # parameters (deterministic, std=0.02 as in _init_weights; biases zero)
    W_kg_proj = 0.02 * jax.random.normal(ks[0], (D, U), jnp.float32)
    b_kg_proj = jnp.zeros((D,), jnp.float32)
    W_att_proj = 0.02 * jax.random.normal(ks[1], (D, U), jnp.float32)
    b_att_proj = jnp.zeros((D,), jnp.float32)
    W_copy_proj = 0.02 * jax.random.normal(ks[2], (D, 2 * D), jnp.float32)
    b_copy_proj = jnp.zeros((D,), jnp.float32)
    W_copy_lm = 0.02 * jax.random.normal(ks[3], (V, D), jnp.float32)
    W_lm = 0.02 * jax.random.normal(ks[4], (V, D), jnp.float32)
    # rec_model.kg_attention pooling parameters (additive attention)
    W_attn = 0.05 * jax.random.normal(ks[5], (U, U), jnp.float32)
    v_attn = 0.05 * jax.random.normal(ks[6], (U, 1), jnp.float32)
    # kg entity embedding table (stand-in for rec_model.get_kg_embeddings / RGCN)
    kg_table = jax.random.normal(ks[7], (NE, U), jnp.float32)
    kg_vocab_mask = (jnp.arange(V) % 3 == 0).astype(jnp.float32)

    # inputs: context entity ids (0 == pad) and surrogate decoder hidden states
    context_entities = jax.random.randint(ks[8], (B, L), 1, NE)
    context_entities = context_entities.at[1, -3:].set(0)            # some padding
    # TODO(synk): dialog_latent is the pretrained BART decoder last_hidden_state;
    # synthesized here since the BART stack is external to this module.
    dialog_latent = jax.random.normal(ks[9], (B, T, D), jnp.float32)

    # --- init-time weight layout prep (hoisted out of the forward path) ---
    wt_kg, brow_kg = prepare_linear(W_kg_proj, b_kg_proj)
    wt_att, brow_att = prepare_linear(W_att_proj, b_att_proj)
    dec_params = prepare_decode_params(W_copy_proj, b_copy_proj,
                                       W_copy_lm, W_lm, kg_vocab_mask)

    # --- get_user_kg_embeddings -------------------------------------------
    entity_mask = (context_entities != 0).astype(jnp.float32)        # (B, L)
    entity_rep = kg_table[context_entities]                          # (B, L, U)
    # TODO(synk): rec_model.pos_encoder / layer_norm internals are external.
    user_rep = kg_attention_pool(entity_rep, entity_mask, W_attn, v_attn)   # (B, U)

    # --- projections (Pallas linear kernels) ------------------------------
    entity_embed = linear(entity_rep, wt_kg, brow_kg)                # (B, L, D)
    user_att = linear(user_rep, wt_att, brow_att)                    # (B, D)

    # --- _decode_forced logits head (fused, V-streaming Pallas kernels) ---
    sum_logits, preds = decode_forced_logits(dialog_latent, user_att, dec_params)

    jax.block_until_ready((entity_embed, user_att, sum_logits, preds))

    # ---------------- pure-JAX references ----------------------------------
    # kg attention (f32)
    t_ref = jnp.tanh(jnp.einsum('blu,uv->blv', entity_rep, W_attn))
    s_ref = jnp.einsum('blu,u->bl', t_ref, v_attn[:, 0])
    s_ref = jnp.where(entity_mask > 0, s_ref, -1e9)
    w_ref = jax.nn.softmax(s_ref, axis=-1)
    user_rep_ref = jnp.einsum('bl,blu->bu', w_ref, entity_rep)
    assert jnp.allclose(user_rep, user_rep_ref, atol=5e-3, rtol=5e-3)

    # linear projections (mirror the kernels' bf16-operand / f32-accum path)
    ee_ref = jnp.einsum('blu,uo->blo', entity_rep.astype(jnp.bfloat16),
                        W_kg_proj.T.astype(jnp.bfloat16),
                        preferred_element_type=jnp.float32) + b_kg_proj
    ua_ref = jnp.dot(user_rep.astype(jnp.bfloat16), W_att_proj.T.astype(jnp.bfloat16),
                     preferred_element_type=jnp.float32) + b_att_proj
    assert jnp.allclose(entity_embed, ee_ref, atol=1e-2, rtol=1e-2)
    assert jnp.allclose(user_att, ua_ref, atol=1e-2, rtol=1e-2)

    # logits head (mirror bf16 weights / f32 accumulation)
    dl_bf = dialog_latent.astype(jnp.bfloat16)
    ua_bf = user_att.astype(jnp.bfloat16)
    wcu_bf = W_copy_proj[:, :D].T.astype(jnp.bfloat16)
    wcd_bf = W_copy_proj[:, D:].T.astype(jnp.bfloat16)
    wcopy_bf = W_copy_lm.T.astype(jnp.bfloat16)
    wlm_bf = W_lm.T.astype(jnp.bfloat16)
    uh_ref = jnp.dot(ua_bf, wcu_bf, preferred_element_type=jnp.float32) + b_copy_proj
    h_ref = (jnp.einsum('btd,de->bte', dl_bf, wcd_bf,
                        preferred_element_type=jnp.float32) + uh_ref[:, None, :])
    h_bf = h_ref.astype(jnp.bfloat16)
    copy_ref = jnp.einsum('btd,dv->btv', h_bf, wcopy_bf,
                          preferred_element_type=jnp.float32)
    vocab_ref = jnp.einsum('btd,dv->btv', dl_bf, wlm_bf,
                           preferred_element_type=jnp.float32)
    ref_logits = vocab_ref + copy_ref * kg_vocab_mask[None, None, :]

    assert sum_logits.shape == (B, T, V) and preds.shape == (B, T)
    assert jnp.allclose(sum_logits, ref_logits, atol=2e-2, rtol=2e-2)
    assert jnp.array_equal(preds, jnp.argmax(sum_logits, axis=-1).astype(jnp.int32))

    print("KERNEL_OK")
</pallas_src>

<mosaic_0001>
module attributes {stable_mosaic.version = 11 : i64} {
  func.func @_kg_attn_kernel(%arg0: i32, %arg1: memref<2x8x32xf32, #tpu.memory_space<vmem>>, %arg2: memref<2x8xf32, #tpu.memory_space<vmem>>, %arg3: memref<32x32xf32, #tpu.memory_space<vmem>>, %arg4: memref<1x1x32xf32, #tpu.memory_space<vmem>>, %arg5: memref<2x32xf32, #tpu.memory_space<vmem>>) attributes {dimension_semantics = [#tpu.dimension_semantics<parallel>], iteration_bounds = array<i64: 1>, scalar_prefetch = 0 : i64, scratch_operands = 0 : i64, tpu.core_type = #tpu.core_type<tc>, window_params = [{transform_indices = @transform_0, window_bounds = array<i64: 2, 8, 32>}, {transform_indices = @transform_1, window_bounds = array<i64: 2, 8>}, {pipeline_mode = #tpu.pipeline_mode<synchronous>, transform_indices = @transform_2, window_bounds = array<i64: 32, 32>}, {pipeline_mode = #tpu.pipeline_mode<synchronous>, transform_indices = @transform_3, window_bounds = array<i64: 1, 1, 32>}, {transform_indices = @transform_4, window_bounds = array<i64: 2, 32>}]} {
    %c0 = arith.constant 0 : index
    %c0_0 = arith.constant 0 : index
    %c0_1 = arith.constant 0 : index
    %0 = vector.load %arg1[%c0, %c0_0, %c0_1] : memref<2x8x32xf32, #tpu.memory_space<vmem>>, vector<2x8x32xf32>
    %1 = vector.shape_cast %0 : vector<2x8x32xf32> to vector<16x32xf32>
    %c0_2 = arith.constant 0 : index
    %c0_3 = arith.constant 0 : index
    %2 = vector.load %arg3[%c0_2, %c0_3] : memref<32x32xf32, #tpu.memory_space<vmem>>, vector<32x32xf32>
    %cst = arith.constant dense<0.000000e+00> : vector<16x32xf32>
    %3 = tpu.matmul %1, %2, %cst {dimension_numbers = #tpu.dot_dimension_numbers<[1], [0], [0], [1], [0, 0, 1, 1], [], []>} : vector<16x32xf32>, vector<32x32xf32>, vector<16x32xf32> -> vector<16x32xf32>
    %4 = math.tanh %3 : vector<16x32xf32>
    %5 = vector.shape_cast %4 : vector<16x32xf32> to vector<2x8x32xf32>
    %c0_4 = arith.constant 0 : index
    %c0_5 = arith.constant 0 : index
    %c0_6 = arith.constant 0 : index
    %6 = vector.load %arg4[%c0_4, %c0_5, %c0_6] : memref<1x1x32xf32, #tpu.memory_space<vmem>>, vector<1x1x32xf32>
    %7 = vector.broadcast %6 : vector<1x1x32xf32> to vector<2x8x32xf32>
    %8 = arith.mulf %5, %7 : vector<2x8x32xf32>
    %cst_7 = arith.constant dense<0.000000e+00> : vector<2x8xf32>
    %9 = vector.multi_reduction <add>, %8, %cst_7 [2] : vector<2x8x32xf32> to vector<2x8xf32>
    %c0_8 = arith.constant 0 : index
    %c0_9 = arith.constant 0 : index
    %10 = vector.load %arg2[%c0_8, %c0_9] : memref<2x8xf32, #tpu.memory_space<vmem>>, vector<2x8xf32>
    %cst_10 = arith.constant 0.000000e+00 : f32
    %11 = vector.broadcast %cst_10 : f32 to vector<2x8xf32>
    %12 = arith.cmpf ogt, %10, %11 : vector<2x8xf32>
    %cst_11 = arith.constant -1.000000e+09 : f32
    %13 = vector.broadcast %cst_11 : f32 to vector<2x8xf32>
    %14 = arith.select %12, %9, %13 : vector<2x8xi1>, vector<2x8xf32>
    %cst_12 = arith.constant dense<0xFF800000> : vector<2xf32>
    %15 = vector.multi_reduction <maximumf>, %14, %cst_12 [1] : vector<2x8xf32> to vector<2xf32>
    %16 = vector.shape_cast %15 : vector<2xf32> to vector<2x1xf32>
    %17 = vector.broadcast %16 : vector<2x1xf32> to vector<2x8xf32>
    %18 = arith.subf %14, %17 : vector<2x8xf32>
    %19 = math.exp %18 : vector<2x8xf32>
    %cst_13 = arith.constant dense<0.000000e+00> : vector<2xf32>
    %20 = vector.multi_reduction <add>, %19, %cst_13 [1] : vector<2x8xf32> to vector<2xf32>
    %21 = vector.shape_cast %20 : vector<2xf32> to vector<2x1xf32>
    %22 = vector.broadcast %21 : vector<2x1xf32> to vector<2x8xf32>
    %23 = arith.divf %19, %22 : vector<2x8xf32>
    %24 = vector.shape_cast %23 : vector<2x8xf32> to vector<2x8x1xf32>
    %25 = vector.broadcast %24 : vector<2x8x1xf32> to vector<2x8x32xf32>
    %26 = arith.mulf %25, %0 : vector<2x8x32xf32>
    %cst_14 = arith.constant dense<0.000000e+00> : vector<2x32xf32>
    %27 = vector.multi_reduction <add>, %26, %cst_14 [1] : vector<2x8x32xf32> to vector<2x32xf32>
    %c0_15 = arith.constant 0 : index
    %c0_16 = arith.constant 0 : index
    %28 = vector.load %arg5[%c0_15, %c0_16] : memref<2x32xf32, #tpu.memory_space<vmem>>, vector<2x32xf32>
    tpu.vector_store %arg5[%c0_15, %c0_16], %27 {strides = array<i32>} : memref<2x32xf32, #tpu.memory_space<vmem>>, vector<2x32xf32>,
    return
  }
  func.func @transform_0(%arg0: i32) -> (i32, i32, i32) {
    %c0_i32 = arith.constant 0 : i32
    %c0_i32_0 = arith.constant 0 : i32
    %c0_i32_1 = arith.constant 0 : i32
    return %arg0, %c0_i32, %c0_i32_0 : i32, i32, i32
  }
  func.func @transform_1(%arg0: i32) -> (i32, i32) {
    %c0_i32 = arith.constant 0 : i32
    %c0_i32_0 = arith.constant 0 : i32
    return %arg0, %c0_i32 : i32, i32
  }
  func.func @transform_2(%arg0: i32) -> (i32, i32) {
    %c0_i32 = arith.constant 0 : i32
    %c0_i32_0 = arith.constant 0 : i32
    %c0_i32_1 = arith.constant 0 : i32
    return %c0_i32, %c0_i32_0 : i32, i32
  }
  func.func @transform_3(%arg0: i32) -> (i32, i32, i32) {
    %c0_i32 = arith.constant 0 : i32
    %c0_i32_0 = arith.constant 0 : i32
    %c0_i32_1 = arith.constant 0 : i32
    %c0_i32_2 = arith.constant 0 : i32
    return %c0_i32, %c0_i32_0, %c0_i32_1 : i32, i32, i32
  }
  func.func @transform_4(%arg0: i32) -> (i32, i32) {
    %c0_i32 = arith.constant 0 : i32
    %c0_i32_0 = arith.constant 0 : i32
    return %arg0, %c0_i32 : i32, i32
  }
}

</mosaic_0001>

<llo_original>
// kernel: tpu_custom_call.1
$region0: #{tpu_custom_call.1}
  #allocation0 [shape = 'u32[]', space=smem, size = 0x4, offset = 0x4, fixed_abs, tag = 'smem constant byte address 0x4 - core index']
  #allocation1 [shape = 'u32[72,128]{1,0:T(1,128)}', space=vmem, size = 0x9000, scoped, tag = 'internal scratch']
  %s0 = inlined_call_operand.hbm [shape: f32[2,8,32], index: 0, kind: input, shape index: {}]
  %s1 = inlined_call_operand.hbm [shape: f32[2,8], index: 1, kind: input, shape index: {}]
  %s2 = inlined_call_operand.hbm [shape: f32[32,32], index: 2, kind: input, shape index: {}]
  %s3 = inlined_call_operand.vmem [shape: f32[1,1,32], index: 3, kind: input, shape index: {}]
  %s4 = inlined_call_operand.hbm [shape: f32[2,32], index: 4, kind: output, shape index: {}]
  %s5 = sld [smem:[#allocation0]]
  $region38: #{tpu_custom_call.1} parent=0
    _
  %s7 = ssub.s32 1, %s5
  %s8 = scalar_select 0, %s7, %s5
  $region1: #{tpu_custom_call.1} parent=0
    #allocation2 [shape = 'u8[8192]{0}', space=vmem, size = 0x2000, scoped, tag = 'input window, operand 0, single buffered']
    #allocation3 [shape = 's32[1]{0}', space=sflag, size = 0x4, scoped, tag = 'scoped memory for tpu_custom_call.1']
    #allocation4 [shape = 's32[1]{0}', space=sflag, size = 0x4, scoped, tag = 'scoped memory for tpu_custom_call.1']
    #allocation5 [shape = 'u8[1024]{0}', space=vmem, size = 0x400, scoped, tag = 'input window, operand 1, single buffered']
    #allocation6 [shape = 's32[1]{0}', space=sflag, size = 0x4, scoped, tag = 'scoped memory for tpu_custom_call.1']
    #allocation7 [shape = 'u8[16384]{0}', space=vmem, size = 0x4000, scoped, tag = 'input window, operand 2, single buffered']
    #allocation8 [shape = 'u8[1024]{0}', space=vmem, size = 0x400, scoped, tag = 'output window, operand 0, single buffered']
    %9 = vsyncpa [#allocation3], 0
    %10 = vsyncpa [#allocation6], 0
    %11 = vsyncpa [#allocation4], 0
    // Predicated region
    $region2: #{tpu_custom_call.1} parent=1 // pred_check
      _
    $region3: #{tpu_custom_call.1} parent=1 // pred_check_branch
      %13 = sbr.rel (0) target = $region5
    $region4: #{tpu_custom_call.1} parent=1 // pred_region
      %15 = vsyncadd [#allocation3], 0
      %s16 = sshll.u32 %s0, 4
      %s17 = int_to_ptr.hbm [resolvable:$true] %s16
      %s18 = sshll.u32 [#allocation2], 4
      %s19 = int_to_ptr.vmem [resolvable:$true] %s18
      %24 = dma.hbm_to_vmem [thread:$0]  %s17, 256, %s19, [#allocation3], 128, 128, 8
    $region5: #{tpu_custom_call.1} parent=1 // pred_fallthru
      _
    // Predicated region
    $region6: #{tpu_custom_call.1} parent=1 // pred_check
      _
    $region7: #{tpu_custom_call.1} parent=1 // pred_check_branch
      %26 = sbr.rel (0) target = $region9
    $region8: #{tpu_custom_call.1} parent=1 // pred_region
      %28 = vsyncadd [#allocation6], 0
      %s30 = sshll.u32 %s1, 4
      %s31 = int_to_ptr.hbm [resolvable:$true] %s30
      %s32 = sshll.u32 [#allocation5], 4
      %s33 = int_to_ptr.vmem [resolvable:$true] %s32
      %35 = dma.hbm_to_vmem [thread:$0]  %s31, 32, %s33, [#allocation6]
    $region9: #{tpu_custom_call.1} parent=1 // pred_fallthru
      _
    // Predicated region
    $region10: #{tpu_custom_call.1} parent=1 // pred_check
      _
    $region11: #{tpu_custom_call.1} parent=1 // pred_check_branch
      %37 = sbr.rel (0) target = $region13
    $region12: #{tpu_custom_call.1} parent=1 // pred_region
      %39 = vsyncadd [#allocation6], 0
      %s40 = sshll.u32 %s2, 4
      %s41 = int_to_ptr.hbm [resolvable:$true] %s40
      %s42 = sshll.u32 [#allocation7], 4
      %s43 = int_to_ptr.vmem [resolvable:$true] %s42
      %48 = dma.hbm_to_vmem [thread:$0]  %s41, 512, %s43, [#allocation6], 128, 128, 8
    $region13: #{tpu_custom_call.1} parent=1 // pred_fallthru
      _
    // Predicated region
    $region14: #{tpu_custom_call.1} parent=1 // pred_check
      _
    $region15: #{tpu_custom_call.1} parent=1 // pred_check_branch
      %50 = sbr.rel (0) target = $region17
    $region16: #{tpu_custom_call.1} parent=1 // pred_region
      _
    $region17: #{tpu_custom_call.1} parent=1 // pred_fallthru
      _
    // Predicated region
    $region18: #{tpu_custom_call.1} parent=1 // pred_check
      _
    $region19: #{tpu_custom_call.1} parent=1 // pred_check_branch
      %52 = sbr.rel (0) target = $region21
    $region20: #{tpu_custom_call.1} parent=1 // pred_region
      %54 = dma.done [#allocation3], 256
    $region21: #{tpu_custom_call.1} parent=1 // pred_fallthru
      _
    // Predicated region
    $region22: #{tpu_custom_call.1} parent=1 // pred_check
      _
    $region23: #{tpu_custom_call.1} parent=1 // pred_check_branch
      %56 = sbr.rel (0) target = $region25
    $region24: #{tpu_custom_call.1} parent=1 // pred_region
      %58 = dma.done [#allocation6], 32
    $region25: #{tpu_custom_call.1} parent=1 // pred_fallthru
      _
    // Predicated region
    $region26: #{tpu_custom_call.1} parent=1 // pred_check
      _
    $region27: #{tpu_custom_call.1} parent=1 // pred_check_branch
      %60 = sbr.rel (0) target = $region29
    $region28: #{tpu_custom_call.1} parent=1 // pred_region
      %62 = dma.done [#allocation6], 512
    $region29: #{tpu_custom_call.1} parent=1 // pred_fallthru
      _
    %v63 = vld [vmem:[#allocation2] sm:$0xff]
    %v64 = vld [vmem:[#allocation2 + $0x8] sm:$0xff]
    %v65 = vld [vmem:[#allocation7] sm:$0xff]
    %v66 = vld [vmem:[#allocation7 + $0x8] sm:$0xff]
    %v67 = vld [vmem:[#allocation7 + $0x10] sm:$0xff]
    %v68 = vld [vmem:[#allocation7 + $0x18] sm:$0xff]
    %vm69 = vcmask 261120
    %v71 = vsel %vm69, %v63, 0
    %v74 = vsel %vm69, %v64, 0
    %76 = vmatpush.msra.mxu0 0.0
    %77 = vmatpush.msra.mxu0 0.0
    %78 = vmatpush.msra.mxu0 0.0
    %79 = vmatpush.msra.mxu0 0.0
    %80 = vmatpush.msra.mxu0 0.0
    %81 = vmatpush.msra.mxu0 0.0
    %82 = vmatpush.msra.mxu0 0.0
    %83 = vmatpush.msra.mxu0 0.0
    %84 = vmatpush.msra.mxu0 0.0
    %85 = vmatpush.msra.mxu0 0.0
    %86 = vmatpush.msra.mxu0 0.0
    %87 = vmatpush.msra.mxu0 0.0
    %88 = vmatpush.msra.mxu0 %v68
    %89 = vmatpush.msra.mxu0 %v67
    %90 = vmatpush.msra.mxu0 %v66
    %91 = vmatpush.msra.mxu0 %v65
    %92 = vmatmul.f32.gmra.mxu0 %v71
    %v93 = vpop.f32.mrf.mxu0
    %v94 = vadd.f32 0.0, %v93
    %95 = vmatmul.f32.gmra.mxu0 %v74
    %v96 = vpop.f32.mrf.mxu0
    %v97 = vadd.f32 0.0, %v96
    %98 = vdwg.mxu0
    %v99 = vtanh.pop %v94
    %v100 = vtanh.pop %v97
    %v101 = vld [vmem:[%s3] sm:$0x1]
    %v103 = vperm.slane %v101, 0
    %v105 = vmul.f32 %v99, %v103
    %v106 = vmul.f32 %v100, %v103
    %v107 = vsel %vm69, %v105, 0.0
    %108 = vadd.xlane.f32.xlu0 %v107
    %v109 = vpop.xlane.xlu0 %108
    %v110 = vsel %vm69, %v106, 0.0
    %111 = vadd.xlane.f32.xlu0 %v110
    %v112 = vpop.xlane.xlu0 %111
    %v113 = vld [vmem:[#allocation5] sm:$0x3]
    %vm114 = vcmp.gt.f32.partialorder %v113, 0.0
    %v117 = vlaneseq
    %v118 = vand.u32 %v117, 127
    %v119 = vperm.slane %v109, %v118
    %v120 = vperm.slane %v112, %v118
    %vm121 = vcmask 1041409
    %v122 = vsel %vm121, %v120, %v119
    %v124 = vsel %vm114, %v122, -1e+09
    %vm125 = vcmask 58368
    %v126 = vsel %vm125, %v124, -inf
    %127 = vmax.xlane.f32.xlu0 %v126
    %v128 = vpop.xlane.xlu0 %127
    %v129 = vsub.f32 %v124, %v128
    %v130 = vmul.f32 %v129, 1.442695
    %v131 = vpow.pop %v130
    %v132 = vsel %vm125, %v131, 0.0
    %133 = vadd.xlane.f32.xlu0 %v132
    %v134 = vpop.xlane.xlu0 %133
    %v135 = vrcp.pop %v134
    %v136 = vmul.f32 %v134, %v135
    %v137 = vsub.f32 1.0, %v136
    %v138 = vmul.f32 %v135, %v137
    %v139 = vadd.f32 %v135, %v138
    %vm140 = vweird.f32 %v134
    %vm141 = vweird.f32 %v135
    %vm142 = vmor %vm140, %vm141
    %v143 = vsel %vm142, %v135, %v139
    %v144 = vand.u32 2147483647, %v134
    %vm145 = vcmp.eq.f32.partialorder %v144, 8.507059e+37
    %v146 = vand.u32 %v134, 2147483648
    %v147 = vor.u32 1.1754944e-38, %v146
    %v148 = vsel %vm145, %v147, %v143
    %v149 = vmul.f32 %v131, %v148
    %v150 = vperm.slane %v149, 0
    %v151 = vlaneseq
    %v152 = vshrl.u32 %v151, 7
    %154 = vset.pattern.permute.xlu0 %v152
    %155 = vperm.xlu0 %154, %v150
    %v156 = vpop.permute.xlu0 %155
    %v157 = vperm.slane %v149, 1
    %v158 = vlaneseq
    %v159 = vshrl.u32 %v158, 7
    %161 = vset.pattern.permute.xlu0 %v159
    %162 = vperm.xlu0 %161, %v157
    %v163 = vpop.permute.xlu0 %162
    %v164 = vmul.f32 %v156, %v63
    %v165 = vmul.f32 %v163, %v64
    %v166 = vsel %vm69, %v164, 0.0
    %v167 = vrot.slane %v166, 4
    %v168 = vadd.f32 %v166, %v167
    %v169 = vrot.slane %v168, 2
    %v170 = vadd.f32 %v168, %v169
    %v171 = vrot.slane %v170, 1
    %v172 = vadd.f32 %v170, %v171
    %v173 = vsel %vm69, %v165, 0.0
    %v174 = vrot.slane %v173, 4
    %v175 = vadd.f32 %v173, %v174
    %v176 = vrot.slane %v175, 2
    %v177 = vadd.f32 %v175, %v176
    %v178 = vrot.slane %v177, 1
    %v179 = vadd.f32 %v177, %v178
    %v182 = vsel %vm121, %v179, %v172
    %vm184 = vcmask 254976
    %185 = vst.msk [vmem:[#allocation8] sm:$0x3] %vm184, %v182
    // Predicated region
    $region30: #{tpu_custom_call.1} parent=1 // pred_check
      _
    $region31: #{tpu_custom_call.1} parent=1 // pred_check_branch
      %187 = sbr.rel (0) target = $region33
    $region32: #{tpu_custom_call.1} parent=1 // pred_region
      %189 = vsyncadd [#allocation4], 0
      %s191 = sshll.u32 [#allocation8], 4
      %s192 = int_to_ptr.vmem [resolvable:$true] %s191
      %s193 = sshll.u32 %s4, 4
      %s194 = int_to_ptr.hbm [resolvable:$true] %s193
      %196 = dma.vmem_to_hbm [thread:$0]  %s192, 32, %s194, [#allocation4]
    $region33: #{tpu_custom_call.1} parent=1 // pred_fallthru
      _
    // Predicated region
    $region34: #{tpu_custom_call.1} parent=1 // pred_check
      _
    $region35: #{tpu_custom_call.1} parent=1 // pred_check_branch
      %198 = sbr.rel (0) target = $region37
    $region36: #{tpu_custom_call.1} parent=1 // pred_region
      %200 = dma.done [#allocation4], 32
    $region37: #{tpu_custom_call.1} parent=1 // pred_fallthru
      _
    %201 = vsyncpa [#allocation3], 1
    %202 = vsyncpa [#allocation6], 1
    %203 = vsyncpa [#allocation4], 1

</llo_original>
